<compile_context>
chip_gen: v7x
topology: tpu7x:2x2x1
jax: 0.10.0
libtpu: 0.0.40
codegen_flags: <defaults>
</compile_context>

<pallas_src>
import jax
import jax.numpy as jnp
from jax.experimental import pallas as pl
from jax.experimental.pallas import tpu as pltpu


def mlp_kernel(x_ref, w1_ref, b1_ref, w2_ref, b2_ref, o_ref):
    # First linear: (tb, K) @ (K, mid) on the MXU, f32 accumulation.
    h = jnp.dot(x_ref[...], w1_ref[...], preferred_element_type=jnp.float32)
    # Bias + ReLU in f32 on the VPU (b1 is (1, mid), broadcasts over batch).
    h = jnp.maximum(h + b1_ref[...], 0.0)
    # Explicit bf16 cast for the second MXU pass, f32 accumulation.
    y = jnp.dot(h.astype(w2_ref.dtype), w2_ref[...],
                preferred_element_type=jnp.float32)
    o_ref[...] = (y + b2_ref[...]).astype(o_ref.dtype)


def _pick_tile_b(B):
    """Pick a batch tile: prefer >=2 grid steps (pipelining; both TCs on v7x)
    and multiples of 128 (keeps v5e's MXU full; bf16 sublane packing safe)."""
    candidates = (512, 384, 256, 128, 64, 32, 16, 8)
    for t in candidates:
        if t <= B // 2 and B % t == 0:
            return t
    for t in candidates:
        if t <= B and B % t == 0:
            return t
    return B


def mlps_forward(x, w1, b1, w2, b2, *, tile_b=None, compute_dtype=jnp.bfloat16):
    B, Din = x.shape
    Din_w, Dmid = w1.shape
    Dout = w2.shape[1]
    assert Din == Din_w
    out_dtype = x.dtype

    # Lane-align the contraction dimension (e.g. 126 -> 128) with zeros; zeros
    # contribute nothing to the dot, so the math is unchanged.
    Din_p = ((Din + 127) // 128) * 128
    if Din_p != Din:
        x = jnp.pad(x, ((0, 0), (0, Din_p - Din)))
        w1 = jnp.pad(w1, ((0, Din_p - Din), (0, 0)))

    # bf16 operands for the MXU; biases stay f32 (added to the f32 accumulator).
    x_c = x.astype(compute_dtype)
    w1_c = w1.astype(compute_dtype)
    w2_c = w2.astype(compute_dtype)
    b1_f = b1.astype(jnp.float32).reshape(1, Dmid)
    b2_f = b2.astype(jnp.float32).reshape(1, Dout)

    if tile_b is None:
        tile_b = _pick_tile_b(B)
    assert B % tile_b == 0, f"batch {B} must be divisible by tile_b {tile_b}"
    grid = (B // tile_b,)

    itemsize = jnp.dtype(compute_dtype).itemsize
    cost = pl.CostEstimate(
        flops=2 * B * (Din_p * Dmid + Dmid * Dout),
        transcendentals=0,
        bytes_accessed=(x_c.size * itemsize
                        + w1_c.size * itemsize
                        + w2_c.size * itemsize
                        + (b1_f.size + b2_f.size) * 4
                        + B * Dout * jnp.dtype(out_dtype).itemsize),
    )

    return pl.pallas_call(
        mlp_kernel,
        out_shape=jax.ShapeDtypeStruct((B, Dout), out_dtype),
        grid_spec=pltpu.PrefetchScalarGridSpec(
            num_scalar_prefetch=0,
            grid=grid,
            in_specs=[
                pl.BlockSpec((tile_b, Din_p), lambda i: (i, 0)),   # x tile over batch
                pl.BlockSpec((Din_p, Dmid), lambda i: (0, 0)),     # W1 (resident)
                pl.BlockSpec((1, Dmid), lambda i: (0, 0)),         # b1 (f32)
                pl.BlockSpec((Dmid, Dout), lambda i: (0, 0)),      # W2 (resident)
                pl.BlockSpec((1, Dout), lambda i: (0, 0)),         # b2 (f32)
            ],
            out_specs=pl.BlockSpec((tile_b, Dout), lambda i: (i, 0)),
        ),
        compiler_params=pltpu.CompilerParams(
            dimension_semantics=("parallel",),     # batch tiles are independent
            vmem_limit_bytes=32 * 1024 * 1024,     # explicit budget (v7x-safe)
        ),
        cost_estimate=cost,
    )(x_c, w1_c, b1_f, w2_c, b2_f)


if __name__ == "__main__":
    # Module hyperparams (consistent with the PyTorch forward):
    #   nodeNum=2  -> in_features = nodeNum * 63 = 126
    #   midnum=128 -> hidden
    #   class_num=2
    node_num = 2
    in_features = node_num * 63       # 126
    midnum = 128
    class_num = 2
    batch = 256                       # small, but enough for 2 pipelined grid steps

    key = jax.random.PRNGKey(0)
    kx, kw1, kb1, kw2, kb2 = jax.random.split(key, 5)

    # Deterministic parameter init (PyTorch nn.Linear-style uniform bounds).
    bound1 = 1.0 / (in_features ** 0.5)
    bound2 = 1.0 / (midnum ** 0.5)
    w1 = jax.random.uniform(kw1, (in_features, midnum), jnp.float32, -bound1, bound1)
    b1 = jax.random.uniform(kb1, (1, midnum), jnp.float32, -bound1, bound1)
    w2 = jax.random.uniform(kw2, (midnum, class_num), jnp.float32, -bound2, bound2)
    b2 = jax.random.uniform(kb2, (1, class_num), jnp.float32, -bound2, bound2)

    x = jax.random.normal(kx, (batch, in_features), jnp.float32)

    out = mlps_forward(x, w1, b1, w2, b2)
    out = jax.block_until_ready(out)
    assert out.shape == (batch, class_num)

    # Reference 1: same math with the same bf16-cast operands (tight tolerance).
    xb = x.astype(jnp.bfloat16).astype(jnp.float32)
    w1b = w1.astype(jnp.bfloat16).astype(jnp.float32)
    w2b = w2.astype(jnp.bfloat16).astype(jnp.float32)
    h = jnp.maximum(xb @ w1b + b1, 0.0).astype(jnp.bfloat16).astype(jnp.float32)
    ref_bf16 = h @ w2b + b2
    assert jnp.allclose(out, ref_bf16, atol=2e-3, rtol=2e-3)

    # Reference 2: full f32 math (loose tolerance — bf16 operand quantization).
    ref_f32 = jnp.maximum(x @ w1 + b1, 0.0) @ w2 + b2
    assert jnp.allclose(out, ref_f32, atol=5e-2, rtol=5e-2)

    print("KERNEL_OK")
</pallas_src>

<mosaic_0001>
module attributes {stable_mosaic.version = 11 : i64} {
  func.func @mlp_kernel(%arg0: i32, %arg1: memref<128x128xbf16, #tpu.memory_space<vmem>>, %arg2: memref<128x128xbf16, #tpu.memory_space<vmem>>, %arg3: memref<1x128xf32, #tpu.memory_space<vmem>>, %arg4: memref<128x2xbf16, #tpu.memory_space<vmem>>, %arg5: memref<1x2xf32, #tpu.memory_space<vmem>>, %arg6: memref<128x2xf32, #tpu.memory_space<vmem>>) attributes {dimension_semantics = [#tpu.dimension_semantics<parallel>], iteration_bounds = array<i64: 2>, scalar_prefetch = 0 : i64, scratch_operands = 0 : i64, tpu.core_type = #tpu.core_type<tc>, window_params = [{transform_indices = @transform_0, window_bounds = array<i64: 128, 128>}, {pipeline_mode = #tpu.pipeline_mode<synchronous>, transform_indices = @transform_1, window_bounds = array<i64: 128, 128>}, {pipeline_mode = #tpu.pipeline_mode<synchronous>, transform_indices = @transform_2, window_bounds = array<i64: 1, 128>}, {pipeline_mode = #tpu.pipeline_mode<synchronous>, transform_indices = @transform_3, window_bounds = array<i64: 128, 2>}, {pipeline_mode = #tpu.pipeline_mode<synchronous>, transform_indices = @transform_4, window_bounds = array<i64: 1, 2>}, {transform_indices = @transform_5, window_bounds = array<i64: 128, 2>}]} {
    %c0 = arith.constant 0 : index
    %c0_0 = arith.constant 0 : index
    %0 = vector.load %arg1[%c0, %c0_0] : memref<128x128xbf16, #tpu.memory_space<vmem>>, vector<128x128xbf16>
    %c0_1 = arith.constant 0 : index
    %c0_2 = arith.constant 0 : index
    %1 = vector.load %arg2[%c0_1, %c0_2] : memref<128x128xbf16, #tpu.memory_space<vmem>>, vector<128x128xbf16>
    %cst = arith.constant dense<0.000000e+00> : vector<128x128xf32>
    %2 = tpu.matmul %0, %1, %cst {dimension_numbers = #tpu.dot_dimension_numbers<[1], [0], [0], [1], [0, 0, 1, 1], [], []>} : vector<128x128xbf16>, vector<128x128xbf16>, vector<128x128xf32> -> vector<128x128xf32>
    %c0_3 = arith.constant 0 : index
    %c0_4 = arith.constant 0 : index
    %3 = vector.load %arg3[%c0_3, %c0_4] : memref<1x128xf32, #tpu.memory_space<vmem>>, vector<1x128xf32>
    %4 = vector.broadcast %3 : vector<1x128xf32> to vector<128x128xf32>
    %5 = arith.addf %2, %4 : vector<128x128xf32>
    %cst_5 = arith.constant 0.000000e+00 : f32
    %6 = vector.broadcast %cst_5 : f32 to vector<128x128xf32>
    %7 = arith.maximumf %5, %6 : vector<128x128xf32>
    %8 = arith.truncf %7 : vector<128x128xf32> to vector<128x128xbf16>
    %c0_6 = arith.constant 0 : index
    %c0_7 = arith.constant 0 : index
    %9 = vector.load %arg4[%c0_6, %c0_7] : memref<128x2xbf16, #tpu.memory_space<vmem>>, vector<128x2xbf16>
    %cst_8 = arith.constant dense<0.000000e+00> : vector<128x2xf32>
    %10 = tpu.matmul %8, %9, %cst_8 {dimension_numbers = #tpu.dot_dimension_numbers<[1], [0], [0], [1], [0, 0, 1, 1], [], []>} : vector<128x128xbf16>, vector<128x2xbf16>, vector<128x2xf32> -> vector<128x2xf32>
    %c0_9 = arith.constant 0 : index
    %c0_10 = arith.constant 0 : index
    %11 = vector.load %arg5[%c0_9, %c0_10] : memref<1x2xf32, #tpu.memory_space<vmem>>, vector<1x2xf32>
    %12 = vector.broadcast %11 : vector<1x2xf32> to vector<128x2xf32>
    %13 = arith.addf %10, %12 : vector<128x2xf32>
    %c0_11 = arith.constant 0 : index
    %c0_12 = arith.constant 0 : index
    %14 = vector.load %arg6[%c0_11, %c0_12] : memref<128x2xf32, #tpu.memory_space<vmem>>, vector<128x2xf32>
    tpu.vector_store %arg6[%c0_11, %c0_12], %13 {strides = array<i32>} : memref<128x2xf32, #tpu.memory_space<vmem>>, vector<128x2xf32>,
    return
  }
  func.func @transform_0(%arg0: i32) -> (i32, i32) {
    %c0_i32 = arith.constant 0 : i32
    %c0_i32_0 = arith.constant 0 : i32
    return %arg0, %c0_i32 : i32, i32
  }
  func.func @transform_1(%arg0: i32) -> (i32, i32) {
    %c0_i32 = arith.constant 0 : i32
    %c0_i32_0 = arith.constant 0 : i32
    %c0_i32_1 = arith.constant 0 : i32
    return %c0_i32, %c0_i32_0 : i32, i32
  }
  func.func @transform_2(%arg0: i32) -> (i32, i32) {
    %c0_i32 = arith.constant 0 : i32
    %c0_i32_0 = arith.constant 0 : i32
    %c0_i32_1 = arith.constant 0 : i32
    return %c0_i32, %c0_i32_0 : i32, i32
  }
  func.func @transform_3(%arg0: i32) -> (i32, i32) {
    %c0_i32 = arith.constant 0 : i32
    %c0_i32_0 = arith.constant 0 : i32
    %c0_i32_1 = arith.constant 0 : i32
    return %c0_i32, %c0_i32_0 : i32, i32
  }
  func.func @transform_4(%arg0: i32) -> (i32, i32) {
    %c0_i32 = arith.constant 0 : i32
    %c0_i32_0 = arith.constant 0 : i32
    %c0_i32_1 = arith.constant 0 : i32
    return %c0_i32, %c0_i32_0 : i32, i32
  }
  func.func @transform_5(%arg0: i32) -> (i32, i32) {
    %c0_i32 = arith.constant 0 : i32
    %c0_i32_0 = arith.constant 0 : i32
    return %arg0, %c0_i32 : i32, i32
  }
}

</mosaic_0001>

<llo_original>
// kernel: tpu_custom_call.1
$region0: #{tpu_custom_call.1}
  #allocation0 [shape = 'u32[]', space=smem, size = 0x4, offset = 0x4, fixed_abs, tag = 'smem constant byte address 0x4 - core index']
  #allocation1 [shape = 'u32[144,128]{1,0:T(1,128)}', space=vmem, size = 0x12000, scoped, tag = 'internal scratch']
  %s0 = inlined_call_operand.hbm [shape: bf16[256,128], index: 0, kind: input, shape index: {}]
  %s1 = inlined_call_operand.vmem [shape: bf16[128,128], index: 1, kind: input, shape index: {}]
  %s2 = inlined_call_operand.vmem [shape: f32[1,128], index: 2, kind: input, shape index: {}]
  %s3 = inlined_call_operand.vmem [shape: bf16[128,2], index: 3, kind: input, shape index: {}]
  %s4 = inlined_call_operand.vmem [shape: f32[1,2], index: 4, kind: input, shape index: {}]
  %s5 = inlined_call_operand.vmem [shape: f32[256,2], index: 5, kind: output, shape index: {}]
  %s6 = sld [smem:[#allocation0]]
  $region57: #{tpu_custom_call.1} parent=0
    _
  %s8 = ssub.s32 1, %s6
  %s9 = scalar_select 0, %s8, %s6
  $region1: #{tpu_custom_call.1} parent=0
    #allocation2 [shape = 'u8[65536]{0}', space=vmem, size = 0x10000, scoped, tag = 'input window, operand 0']
    #allocation3 [shape = 's32[2]{0}', space=sflag, size = 0x8, scoped, tag = 'scoped memory for tpu_custom_call.1']
    %10 = vsyncpa [#allocation3], 0
    %s11 = scalar_lea.sflag [#allocation3], 1
    %12 = vsyncpa %s11, 0
    loop: start=0, step=1, limit=4
    $region2: #{tpu_custom_call.1} parent=1 // loop_pre_header
      _
    $region3: #{tpu_custom_call.1} parent=1 // loop_header
      %s14 = sphi 0, %s18
      %p15 = scmp.ge.s32.totalorder %s14, 4
      %s24 = sphi 0, %s26
      %s27 = sphi 0, %s24
      %s28 = sphi 0, %s27
      %s44 = sphi 0, %s28
      %s48 = sphi 0, %s48
      %s50 = sphi 0, %s48
      %s51 = sphi 0, %s50
      %s65 = sphi 0, %s51
      %s69 = sphi 0, %s69
      %s71 = sphi 0, %s69
      %s72 = sphi 0, %s71
      %s86 = sphi 0, %s72
      %s90 = sphi 0, %s90
      %s92 = sphi 0, %s90
      %s93 = sphi 0, %s92
      %s107 = sphi 0, %s93
      %s111 = sphi 0, %s111
      %s113 = sphi 0, %s111
      %s114 = sphi 0, %s113
      %s128 = sphi 0, %s114
      %s134 = sphi 0, %s136
      %s137 = sphi 0, %s134
      %s138 = sphi 0, %s137
      %s154 = sphi 0, %s138
    $region4: #{tpu_custom_call.1} parent=1 // loop_header_branch
      %17 = sbr.rel (%p15) target = $region8
    $region5: #{tpu_custom_call.1} parent=1 // loop_body
      %s19 = ssub.s32 %s14, 1
      %s20 = ssub.s32 %s14, 2
      %s21 = sadd.s32 %s14, 1
      %s22 = ssub.s32 %s14, %s21
      %p23 = scmp.eq.s32.totalorder %s22, 0
      %s25 = sadd.s32 %s24, 1
      %s26 = scalar_select %p23, %s24, %s25
      %p29 = pneg %p23
      %p30 = scmp.eq.s32.totalorder %s14, 1
      %p31 = por %p29, %p30
      %p32 = scmp.ne.s32.totalorder %s24, %s27
      %p33 = scmp.eq.s32.totalorder %s14, 0
      %p34 = por %p32, %p33
      %p35 = scmp.ne.s32.totalorder %s24, %s27
      %p36 = scmp.eq.s32.totalorder %s19, 1
      %p37 = por %p35, %p36
      %p38 = scmp.ne.s32.totalorder %s27, %s28
      %p39 = scmp.eq.s32.totalorder %s19, 0
      %p40 = por %p38, %p39
      %p41 = scmp.ne.s32.totalorder %s27, %s28
      %p42 = scmp.eq.s32.totalorder %s20, 1
      %p43 = por %p41, %p42
      %p45 = scmp.ne.s32.totalorder %s28, %s44
      %p46 = scmp.eq.s32.totalorder %s20, 0
      %p47 = por %p45, %p46
      %s49 = sadd.s32 %s48, 1
      %p52 = scmp.eq.s32.totalorder %s14, 1
      %p53 = scmp.ne.s32.totalorder %s48, %s50
      %p54 = scmp.eq.s32.totalorder %s14, 0
      %p55 = por %p53, %p54
      %p56 = scmp.ne.s32.totalorder %s48, %s50
      %p57 = scmp.eq.s32.totalorder %s19, 1
      %p58 = por %p56, %p57
      %p59 = scmp.ne.s32.totalorder %s50, %s51
      %p60 = scmp.eq.s32.totalorder %s19, 0
      %p61 = por %p59, %p60
      %p62 = scmp.ne.s32.totalorder %s50, %s51
      %p63 = scmp.eq.s32.totalorder %s20, 1
      %p64 = por %p62, %p63
      %p66 = scmp.ne.s32.totalorder %s51, %s65
      %p67 = scmp.eq.s32.totalorder %s20, 0
      %p68 = por %p66, %p67
      %s70 = sadd.s32 %s69, 1
      %p73 = scmp.eq.s32.totalorder %s14, 1
      %p74 = scmp.ne.s32.totalorder %s69, %s71
      %p75 = scmp.eq.s32.totalorder %s14, 0
      %p76 = por %p74, %p75
      %p77 = scmp.ne.s32.totalorder %s69, %s71
      %p78 = scmp.eq.s32.totalorder %s19, 1
      %p79 = por %p77, %p78
      %p80 = scmp.ne.s32.totalorder %s71, %s72
      %p81 = scmp.eq.s32.totalorder %s19, 0
      %p82 = por %p80, %p81
      %p83 = scmp.ne.s32.totalorder %s71, %s72
      %p84 = scmp.eq.s32.totalorder %s20, 1
      %p85 = por %p83, %p84
      %p87 = scmp.ne.s32.totalorder %s72, %s86
      %p88 = scmp.eq.s32.totalorder %s20, 0
      %p89 = por %p87, %p88
      %s91 = sadd.s32 %s90, 1
      %p94 = scmp.eq.s32.totalorder %s14, 1
      %p95 = scmp.ne.s32.totalorder %s90, %s92
      %p96 = scmp.eq.s32.totalorder %s14, 0
      %p97 = por %p95, %p96
      %p98 = scmp.ne.s32.totalorder %s90, %s92
      %p99 = scmp.eq.s32.totalorder %s19, 1
      %p100 = por %p98, %p99
      %p101 = scmp.ne.s32.totalorder %s92, %s93
      %p102 = scmp.eq.s32.totalorder %s19, 0
      %p103 = por %p101, %p102
      %p104 = scmp.ne.s32.totalorder %s92, %s93
      %p105 = scmp.eq.s32.totalorder %s20, 1
      %p106 = por %p104, %p105
      %p108 = scmp.ne.s32.totalorder %s93, %s107
      %p109 = scmp.eq.s32.totalorder %s20, 0
      %p110 = por %p108, %p109
      %s112 = sadd.s32 %s111, 1
      %p115 = scmp.eq.s32.totalorder %s14, 1
      %p116 = scmp.ne.s32.totalorder %s111, %s113
      %p117 = scmp.eq.s32.totalorder %s14, 0
      %p118 = por %p116, %p117
      %p119 = scmp.ne.s32.totalorder %s111, %s113
      %p120 = scmp.eq.s32.totalorder %s19, 1
      %p121 = por %p119, %p120
      %p122 = scmp.ne.s32.totalorder %s113, %s114
      %p123 = scmp.eq.s32.totalorder %s19, 0
      %p124 = por %p122, %p123
      %p125 = scmp.ne.s32.totalorder %s113, %s114
      %p126 = scmp.eq.s32.totalorder %s20, 1
      %p127 = por %p125, %p126
      %p129 = scmp.ne.s32.totalorder %s114, %s128
      %p130 = scmp.eq.s32.totalorder %s20, 0
      %p131 = por %p129, %p130
      %s132 = ssub.s32 %s14, %s21
      %p133 = scmp.eq.s32.totalorder %s132, 0
      %s135 = sadd.s32 %s134, 1
      %s136 = scalar_select %p133, %s134, %s135
      %p139 = pneg %p133
      %p140 = scmp.eq.s32.totalorder %s14, 1
      %p141 = por %p139, %p140
      %p142 = scmp.ne.s32.totalorder %s134, %s137
      %p143 = scmp.eq.s32.totalorder %s14, 0
      %p144 = por %p142, %p143
      %p145 = scmp.ne.s32.totalorder %s134, %s137
      %p146 = scmp.eq.s32.totalorder %s19, 1
      %p147 = por %p145, %p146
      %p148 = scmp.ne.s32.totalorder %s137, %s138
      %p149 = scmp.eq.s32.totalorder %s19, 0
      %p150 = por %p148, %p149
      %p151 = scmp.ne.s32.totalorder %s137, %s138
      %p152 = scmp.eq.s32.totalorder %s20, 1
      %p153 = por %p151, %p152
      %p155 = scmp.ne.s32.totalorder %s138, %s154
      %p156 = scmp.eq.s32.totalorder %s20, 0
      %p157 = por %p155, %p156
      %p158 = scmp.le.s32.totalorder 1, %s14
      %p159 = scmp.lt.s32.totalorder %s14, 3
      %p160 = pnand %p158, %p159
      %p161 = pneg %p160
      // Predicated region
      $region9: #{tpu_custom_call.1} parent=5 // pred_check
        _
      $region10: #{tpu_custom_call.1} parent=5 // pred_check_branch
        %163 = sbr.rel (%p160) target = $region12
      $region11: #{tpu_custom_call.1} parent=5 // pred_region
        %s164 = ssub.s32 %s14, 1
        // Predicated region
        $region13: #{tpu_custom_call.1} parent=11 // pred_check
          %p165 = pneg %p61
        $region14: #{tpu_custom_call.1} parent=11 // pred_check_branch
          %167 = sbr.rel (%p165) target = $region16
        $region15: #{tpu_custom_call.1} parent=11 // pred_region
          _
        $region16: #{tpu_custom_call.1} parent=11 // pred_fallthru
          _
        // Predicated region
        $region17: #{tpu_custom_call.1} parent=11 // pred_check
          %p168 = pneg %p82
        $region18: #{tpu_custom_call.1} parent=11 // pred_check_branch
          %170 = sbr.rel (%p168) target = $region20
        $region19: #{tpu_custom_call.1} parent=11 // pred_region
          _
        $region20: #{tpu_custom_call.1} parent=11 // pred_fallthru
          _
        // Predicated region
        $region21: #{tpu_custom_call.1} parent=11 // pred_check
          %p171 = pneg %p103
        $region22: #{tpu_custom_call.1} parent=11 // pred_check_branch
          %173 = sbr.rel (%p171) target = $region24
        $region23: #{tpu_custom_call.1} parent=11 // pred_region
          _
        $region24: #{tpu_custom_call.1} parent=11 // pred_fallthru
          _
        // Predicated region
        $region25: #{tpu_custom_call.1} parent=11 // pred_check
          %p174 = pneg %p124
        $region26: #{tpu_custom_call.1} parent=11 // pred_check_branch
          %176 = sbr.rel (%p174) target = $region28
        $region27: #{tpu_custom_call.1} parent=11 // pred_region
          _
        $region28: #{tpu_custom_call.1} parent=11 // pred_fallthru
          _
      $region12: #{tpu_custom_call.1} parent=5 // pred_fallthru
        _
      %p177 = scmp.lt.s32.totalorder %s14, 2
      // Predicated region
      $region29: #{tpu_custom_call.1} parent=5 // pred_check
        %p178 = pneg %p177
      $region30: #{tpu_custom_call.1} parent=5 // pred_check_branch
        %180 = sbr.rel (%p178) target = $region32
      $region31: #{tpu_custom_call.1} parent=5 // pred_region
        // Predicated region
        $region33: #{tpu_custom_call.1} parent=31 // pred_check
          %p181 = pneg %p34
        $region34: #{tpu_custom_call.1} parent=31 // pred_check_branch
          %183 = sbr.rel (%p181) target = $region36
        $region35: #{tpu_custom_call.1} parent=31 // pred_region
          %s184 = sand.u32 %s24, 1
          %s185 = scalar_lea.sflag [#allocation3], %s184
          %s186 = sand.u32 %s24, 1
          %s187 = smul.addr %s186, 64
          %s188 = scalar_lea.vmem [#allocation2], %s187
          %s189 = smul.u32 16, %s14
          %s191 = ssub.s32 1024, 1024
          %192 = vsyncadd %s185, %s191
          %s193 = smul.addr %s189, 64
          %s194 = scalar_lea.hbm %s0, %s193
          %s195 = sshll.u32 %s188, 4
          %s196 = int_to_ptr.vmem [resolvable:$true] %s195
          %201 = dma.hbm_to_vmem [thread:$0]  %s194, 1024, %s196, %s185, 64, 64, 4
        $region36: #{tpu_custom_call.1} parent=31 // pred_fallthru
          _
      $region32: #{tpu_custom_call.1} parent=5 // pred_fallthru
        _
      %p202 = scmp.le.s32.totalorder 1, %s14
      %p203 = scmp.lt.s32.totalorder %s14, 3
      %p204 = pnand %p202, %p203
      %p205 = pneg %p204
      // Predicated region
      $region37: #{tpu_custom_call.1} parent=5 // pred_check
        _
      $region38: #{tpu_custom_call.1} parent=5 // pred_check_branch
        %207 = sbr.rel (%p204) target = $region40
      $region39: #{tpu_custom_call.1} parent=5 // pred_region
        %s208 = ssub.s32 %s14, 1
        %s209 = sand.u32 %s27, 1
        %s210 = scalar_lea.sflag [#allocation3], %s209
        %s211 = sand.u32 %s27, 1
        %s212 = smul.addr %s211, 64
        %s213 = scalar_lea.vmem [#allocation2], %s212
        // Predicated region
        $region41: #{tpu_custom_call.1} parent=39 // pred_check
          %p214 = pneg %p40
        $region42: #{tpu_custom_call.1} parent=39 // pred_check_branch
          %216 = sbr.rel (%p214) target = $region44
        $region43: #{tpu_custom_call.1} parent=39 // pred_region
          %217 = dma.done %s210, 1024
        $region44: #{tpu_custom_call.1} parent=39 // pred_fallthru
          _
        %s218 = sand.u32 %s27, 1
        %s219 = scalar_lea.sflag [#allocation3], %s218
        %s220 = sand.u32 %s27, 1
        %s221 = smul.addr %s220, 64
        %s222 = scalar_lea.vmem [#allocation2], %s221
        %p223 = pneg %p40
        %p224 = pneg %p37
        %p225 = pneg %p61
        %p226 = pneg %p58
        %p227 = pneg %p82
        %p228 = pneg %p79
        %p229 = pneg %p103
        %p230 = pneg %p100
        %p231 = pneg %p124
        %p232 = pneg %p121
        %p233 = pneg %p150
        %p234 = pneg %p147
        %s235 = smul.u32 16, %s19
        %p236 = scmp.lt.s32.totalorder %s235, 31
        %s237 = scalar_select %p236, %s235, 31
        %s238 = smul.addr %s237, 8
        %s239 = scalar_lea.vmem %s5, %s238
        %s240 = smul.u32 16, %s19
        %s241 = smul.u32 16, %s19
        %p242 = scmp.lt.s32.totalorder %s241, 31
        %s243 = scalar_select %p242, %s241, 31
        %s244 = smul.addr %s243, 8
        %s245 = scalar_lea.vmem %s5, %s244
        %s246 = smul.u32 16, %s19
        %v248 = vld [vmem:[%s213] sm:$0xf]
        %v249 = vld [vmem:[%s213 + $0x4] sm:$0xf]
        %v250 = vld [vmem:[%s213 + $0x8] sm:$0xf]
        %v251 = vld [vmem:[%s213 + $0xc] sm:$0xf]
        %v252 = vld [vmem:[%s213 + $0x10] sm:$0xf]
        %v253 = vld [vmem:[%s213 + $0x14] sm:$0xf]
        %v254 = vld [vmem:[%s213 + $0x18] sm:$0xf]
        %v255 = vld [vmem:[%s213 + $0x1c] sm:$0xf]
        %v256 = vld [vmem:[%s213 + $0x20] sm:$0xf]
        %v257 = vld [vmem:[%s213 + $0x24] sm:$0xf]
        %v258 = vld [vmem:[%s213 + $0x28] sm:$0xf]
        %v259 = vld [vmem:[%s213 + $0x2c] sm:$0xf]
        %v260 = vld [vmem:[%s213 + $0x30] sm:$0xf]
        %v261 = vld [vmem:[%s213 + $0x34] sm:$0xf]
        %v262 = vld [vmem:[%s213 + $0x38] sm:$0xf]
        %v263 = vld [vmem:[%s213 + $0x3c] sm:$0xf]
        %v264 = vld [vmem:[%s1] sm:$0xf]
        %v265 = vld [vmem:[%s1 + $0x4] sm:$0xf]
        %v266 = vld [vmem:[%s1 + $0x8] sm:$0xf]
        %v267 = vld [vmem:[%s1 + $0xc] sm:$0xf]
        %v268 = vld [vmem:[%s1 + $0x10] sm:$0xf]
        %v269 = vld [vmem:[%s1 + $0x14] sm:$0xf]
        %v270 = vld [vmem:[%s1 + $0x18] sm:$0xf]
        %v271 = vld [vmem:[%s1 + $0x1c] sm:$0xf]
        %v272 = vld [vmem:[%s1 + $0x20] sm:$0xf]
        %v273 = vld [vmem:[%s1 + $0x24] sm:$0xf]
        %v274 = vld [vmem:[%s1 + $0x28] sm:$0xf]
        %v275 = vld [vmem:[%s1 + $0x2c] sm:$0xf]
        %v276 = vld [vmem:[%s1 + $0x30] sm:$0xf]
        %v277 = vld [vmem:[%s1 + $0x34] sm:$0xf]
        %v278 = vld [vmem:[%s1 + $0x38] sm:$0xf]
        %v279 = vld [vmem:[%s1 + $0x3c] sm:$0xf]
        %v280 = vld [vmem:[%s2] sm:$0x1]
        %v282 = vlaneseq
        %v283 = vshrl.u32 %v282, 7
        %v284 = vsub.s32 0, %v283
        %v285 = vrot.slane %v280, %v284
        %v303 = vunpack.c.l.b16 %v248
        %v304 = vunpack.c.l.b16 %v249
        %v305 = vunpack.c.l.b16 %v250
        %v306 = vunpack.c.l.b16 %v251
        %v307 = vunpack.c.l.b16 %v252
        %v308 = vunpack.c.l.b16 %v253
        %v309 = vunpack.c.l.b16 %v254
        %v310 = vunpack.c.l.b16 %v255
        %v311 = vunpack.c.l.b16 %v256
        %v312 = vunpack.c.l.b16 %v257
        %v313 = vunpack.c.l.b16 %v258
        %v314 = vunpack.c.l.b16 %v259
        %v315 = vunpack.c.l.b16 %v260
        %v316 = vunpack.c.l.b16 %v261
        %v317 = vunpack.c.l.b16 %v262
        %v318 = vunpack.c.l.b16 %v263
        %v319 = vpack.c.b16 %v304, %v303
        %v320 = vpack.c.b16 %v306, %v305
        %v321 = vpack.c.b16 %v308, %v307
        %v322 = vpack.c.b16 %v310, %v309
        %v323 = vpack.c.b16 %v312, %v311
        %v324 = vpack.c.b16 %v314, %v313
        %v325 = vpack.c.b16 %v316, %v315
        %v326 = vpack.c.b16 %v318, %v317
        %v351 = vunpack.c.l.b16 %v264
        %v352 = vunpack.c.l.b16 %v265
        %v353 = vunpack.c.l.b16 %v266
        %v354 = vunpack.c.l.b16 %v267
        %v355 = vunpack.c.l.b16 %v268
        %v356 = vunpack.c.l.b16 %v269
        %v357 = vunpack.c.l.b16 %v270
        %v358 = vunpack.c.l.b16 %v271
        %v359 = vunpack.c.l.b16 %v272
        %v360 = vunpack.c.l.b16 %v273
        %v361 = vunpack.c.l.b16 %v274
        %v362 = vunpack.c.l.b16 %v275
        %v363 = vunpack.c.l.b16 %v276
        %v364 = vunpack.c.l.b16 %v277
        %v365 = vunpack.c.l.b16 %v278
        %v366 = vunpack.c.l.b16 %v279
        %v367 = vpack.c.b16 %v352, %v351
        %v368 = vpack.c.b16 %v354, %v353
        %v369 = vpack.c.b16 %v356, %v355
        %v370 = vpack.c.b16 %v358, %v357
        %v371 = vpack.c.b16 %v360, %v359
        %v372 = vpack.c.b16 %v362, %v361
        %v373 = vpack.c.b16 %v364, %v363
        %v374 = vpack.c.b16 %v366, %v365
        %383 = vmatprep.subr.bf16.mxu0 0
        %384 = vmatpush1.bf16.msra.mxu0 %v367
        %385 = vmatprep.subr.bf16.mxu0 0
        %386 = vmatpush1.bf16.msra.mxu0 %v368
        %387 = vmatprep.subr.bf16.mxu0 0
        %388 = vmatpush1.bf16.msra.mxu0 %v369
        %389 = vmatprep.subr.bf16.mxu0 0
        %390 = vmatpush1.bf16.msra.mxu0 %v370
        %391 = vmatprep.subr.bf16.mxu0 0
        %392 = vmatpush1.bf16.msra.mxu0 %v371
        %393 = vmatprep.subr.bf16.mxu0 0
        %394 = vmatpush1.bf16.msra.mxu0 %v372
        %395 = vmatprep.subr.bf16.mxu0 0
        %396 = vmatpush1.bf16.msra.mxu0 %v373
        %397 = vmatprep.subr.bf16.mxu0 0
        %398 = vmatpush1.bf16.msra.mxu0 %v374
        %399 = vmatprep.subr.bf16.mxu0 0
        %400 = vmatpush1.bf16.msra.mxu0 0
        %401 = vmatprep.subr.bf16.mxu0 0
        %402 = vmatpush1.bf16.msra.mxu0 0
        %403 = vmatprep.subr.bf16.mxu0 0
        %404 = vmatpush1.bf16.msra.mxu0 0
        %405 = vmatprep.subr.bf16.mxu0 0
        %406 = vmatpush1.bf16.msra.mxu0 0
        %407 = vmatprep.subr.bf16.mxu0 0
        %408 = vmatpush1.bf16.msra.mxu0 0
        %409 = vmatprep.subr.bf16.mxu0 0
        %410 = vmatpush1.bf16.msra.mxu0 0
        %411 = vmatprep.subr.bf16.mxu0 0
        %412 = vmatpush1.bf16.msra.mxu0 0
        %413 = vmatprep.subr.bf16.mxu0 0
        %414 = vmatpush1.bf16.msra.mxu0 0
        %415 = vmatprep.mubr.bf16.mxu0 0
        %416 = vmatmul.mubr.bf16.gmra.mrb[0].mxu0 %v319
        %v417 = vpop.f32.mrb[0].mxu0
        %v418 = vadd.f32 %v285, %v417
        %v419 = vpop.f32.mrb[0].mxu0
        %v420 = vpop.f32.mrb[0].mxu0
        %v421 = vadd.f32 %v285, %v420
        %v422 = vpop.f32.mrb[0].mxu0
        %423 = vmatprep.mubr.bf16.mxu0 0
        %424 = vmatmul.mubr.bf16.gmra.mrb[0].mxu0 %v320
        %v425 = vpop.f32.mrb[0].mxu0
        %v426 = vadd.f32 %v285, %v425
        %v427 = vpop.f32.mrb[0].mxu0
        %v428 = vpop.f32.mrb[0].mxu0
        %v429 = vadd.f32 %v285, %v428
        %v430 = vpop.f32.mrb[0].mxu0
        %431 = vmatprep.mubr.bf16.mxu0 0
        %432 = vmatmul.mubr.bf16.gmra.mrb[0].mxu0 %v321
        %v433 = vpop.f32.mrb[0].mxu0
        %v434 = vadd.f32 %v285, %v433
        %v435 = vpop.f32.mrb[0].mxu0
        %v436 = vpop.f32.mrb[0].mxu0
        %v437 = vadd.f32 %v285, %v436
        %v438 = vpop.f32.mrb[0].mxu0
        %439 = vmatprep.mubr.bf16.mxu0 0
        %440 = vmatmul.mubr.bf16.gmra.mrb[0].mxu0 %v322
        %v441 = vpop.f32.mrb[0].mxu0
        %v442 = vadd.f32 %v285, %v441
        %v443 = vpop.f32.mrb[0].mxu0
        %v444 = vpop.f32.mrb[0].mxu0
        %v445 = vadd.f32 %v285, %v444
        %v446 = vpop.f32.mrb[0].mxu0
        %447 = vmatprep.mubr.bf16.mxu0 0
        %448 = vmatmul.mubr.bf16.gmra.mrb[0].mxu0 %v323
        %v449 = vpop.f32.mrb[0].mxu0
        %v450 = vadd.f32 %v285, %v449
        %v451 = vpop.f32.mrb[0].mxu0
        %v452 = vpop.f32.mrb[0].mxu0
        %v453 = vadd.f32 %v285, %v452
        %v454 = vpop.f32.mrb[0].mxu0
        %455 = vmatprep.mubr.bf16.mxu0 0
        %456 = vmatmul.mubr.bf16.gmra.mrb[0].mxu0 %v324
        %v457 = vpop.f32.mrb[0].mxu0
        %v458 = vadd.f32 %v285, %v457
        %v459 = vpop.f32.mrb[0].mxu0
        %v460 = vpop.f32.mrb[0].mxu0
        %v461 = vadd.f32 %v285, %v460
        %v462 = vpop.f32.mrb[0].mxu0
        %463 = vmatprep.mubr.bf16.mxu0 0
        %464 = vmatmul.mubr.bf16.gmra.mrb[0].mxu0 %v325
        %v465 = vpop.f32.mrb[0].mxu0
        %v466 = vadd.f32 %v285, %v465
        %v467 = vpop.f32.mrb[0].mxu0
        %v468 = vpop.f32.mrb[0].mxu0
        %v469 = vadd.f32 %v285, %v468
        %v470 = vpop.f32.mrb[0].mxu0
        %471 = vmatprep.mubr.bf16.mxu0 0
        %472 = vmatmul.mubr.bf16.gmra.mrb[0].mxu0 %v326
        %v473 = vpop.f32.mrb[0].mxu0
        %v474 = vadd.f32 %v285, %v473
        %v475 = vpop.f32.mrb[0].mxu0
        %v476 = vpop.f32.mrb[0].mxu0
        %v477 = vadd.f32 %v285, %v476
        %v478 = vpop.f32.mrb[0].mxu0
        %479 = vdwg.mxu0
        %v480 = vmax.f32 %v418, 0.0
        %v481 = vmax.f32 %v421, 0.0
        %v482 = vmax.f32 %v426, 0.0
        %v483 = vmax.f32 %v429, 0.0
        %v484 = vmax.f32 %v434, 0.0
        %v485 = vmax.f32 %v437, 0.0
        %v486 = vmax.f32 %v442, 0.0
        %v487 = vmax.f32 %v445, 0.0
        %v488 = vmax.f32 %v450, 0.0
        %v489 = vmax.f32 %v453, 0.0
        %v490 = vmax.f32 %v458, 0.0
        %v491 = vmax.f32 %v461, 0.0
        %v492 = vmax.f32 %v466, 0.0
        %v493 = vmax.f32 %v469, 0.0
        %v494 = vmax.f32 %v474, 0.0
        %v495 = vmax.f32 %v477, 0.0
        %v496 = vpack.c.bf16 %v481, %v480
        %v497 = vpack.c.bf16 %v483, %v482
        %v498 = vpack.c.bf16 %v485, %v484
        %v499 = vpack.c.bf16 %v487, %v486
        %v500 = vpack.c.bf16 %v489, %v488
        %v501 = vpack.c.bf16 %v491, %v490
        %v502 = vpack.c.bf16 %v493, %v492
        %v503 = vpack.c.bf16 %v495, %v494
        %v504 = vld [vmem:[%s3] sm:$0xf]
        %v505 = vld [vmem:[%s3 + $0x4] sm:$0xf]
        %v506 = vld [vmem:[%s3 + $0x8] sm:$0xf]
        %v507 = vld [vmem:[%s3 + $0xc] sm:$0xf]
        %v508 = vld [vmem:[%s3 + $0x10] sm:$0xf]
        %v509 = vld [vmem:[%s3 + $0x14] sm:$0xf]
        %v510 = vld [vmem:[%s3 + $0x18] sm:$0xf]
        %v511 = vld [vmem:[%s3 + $0x1c] sm:$0xf]
        %v512 = vld [vmem:[%s3 + $0x20] sm:$0xf]
        %v513 = vld [vmem:[%s3 + $0x24] sm:$0xf]
        %v514 = vld [vmem:[%s3 + $0x28] sm:$0xf]
        %v515 = vld [vmem:[%s3 + $0x2c] sm:$0xf]
        %v516 = vld [vmem:[%s3 + $0x30] sm:$0xf]
        %v517 = vld [vmem:[%s3 + $0x34] sm:$0xf]
        %v518 = vld [vmem:[%s3 + $0x38] sm:$0xf]
        %v519 = vld [vmem:[%s3 + $0x3c] sm:$0xf]
        %v520 = vld [vmem:[%s4] sm:$0x1]
        %v522 = vlaneseq
        %v523 = vshrl.u32 %v522, 7
        %v524 = vsub.s32 0, %v523
        %v525 = vrot.slane %v520, %v524
        %v543 = vunpack.c.l.b16 %v504
        %v544 = vunpack.c.l.b16 %v505
        %v545 = vunpack.c.l.b16 %v506
        %v546 = vunpack.c.l.b16 %v507
        %v547 = vunpack.c.l.b16 %v508
        %v548 = vunpack.c.l.b16 %v509
        %v549 = vunpack.c.l.b16 %v510
        %v550 = vunpack.c.l.b16 %v511
        %v551 = vunpack.c.l.b16 %v512
        %v552 = vunpack.c.l.b16 %v513
        %v553 = vunpack.c.l.b16 %v514
        %v554 = vunpack.c.l.b16 %v515
        %v555 = vunpack.c.l.b16 %v516
        %v556 = vunpack.c.l.b16 %v517
        %v557 = vunpack.c.l.b16 %v518
        %v558 = vunpack.c.l.b16 %v519
        %v559 = vpack.c.b16 %v544, %v543
        %v560 = vpack.c.b16 %v546, %v545
        %v561 = vpack.c.b16 %v548, %v547
        %v562 = vpack.c.b16 %v550, %v549
        %v563 = vpack.c.b16 %v552, %v551
        %v564 = vpack.c.b16 %v554, %v553
        %v565 = vpack.c.b16 %v556, %v555
        %v566 = vpack.c.b16 %v558, %v557
        %575 = vmatprep.subr.bf16.mxu0 0
        %576 = vmatpush1.bf16.msra.mxu0 %v559
        %577 = vmatprep.subr.bf16.mxu0 0
        %578 = vmatpush1.bf16.msra.mxu0 %v560
        %579 = vmatprep.subr.bf16.mxu0 0
        %580 = vmatpush1.bf16.msra.mxu0 %v561
        %581 = vmatprep.subr.bf16.mxu0 0
        %582 = vmatpush1.bf16.msra.mxu0 %v562
        %583 = vmatprep.subr.bf16.mxu0 0
        %584 = vmatpush1.bf16.msra.mxu0 %v563
        %585 = vmatprep.subr.bf16.mxu0 0
        %586 = vmatpush1.bf16.msra.mxu0 %v564
        %587 = vmatprep.subr.bf16.mxu0 0
        %588 = vmatpush1.bf16.msra.mxu0 %v565
        %589 = vmatprep.subr.bf16.mxu0 0
        %590 = vmatpush1.bf16.msra.mxu0 %v566
        %591 = vmatprep.subr.bf16.mxu0 0
        %592 = vmatpush1.bf16.msra.mxu0 0
        %593 = vmatprep.subr.bf16.mxu0 0
        %594 = vmatpush1.bf16.msra.mxu0 0
        %595 = vmatprep.subr.bf16.mxu0 0
        %596 = vmatpush1.bf16.msra.mxu0 0
        %597 = vmatprep.subr.bf16.mxu0 0
        %598 = vmatpush1.bf16.msra.mxu0 0
        %599 = vmatprep.subr.bf16.mxu0 0
        %600 = vmatpush1.bf16.msra.mxu0 0
        %601 = vmatprep.subr.bf16.mxu0 0
        %602 = vmatpush1.bf16.msra.mxu0 0
        %603 = vmatprep.subr.bf16.mxu0 0
        %604 = vmatpush1.bf16.msra.mxu0 0
        %605 = vmatprep.subr.bf16.mxu0 0
        %606 = vmatpush1.bf16.msra.mxu0 0
        %607 = vmatprep.mubr.bf16.mxu0 0
        %608 = vmatmul.mubr.bf16.gmra.mrb[0].mxu0 %v496
        %v609 = vpop.f32.mrb[0].mxu0
        %v610 = vadd.f32 %v525, %v609
        %v611 = vpop.f32.mrb[0].mxu0
        %v612 = vpop.f32.mrb[0].mxu0
        %v613 = vadd.f32 %v525, %v612
        %v614 = vpop.f32.mrb[0].mxu0
        %615 = vmatprep.mubr.bf16.mxu0 0
        %616 = vmatmul.mubr.bf16.gmra.mrb[0].mxu0 %v497
        %v617 = vpop.f32.mrb[0].mxu0
        %v618 = vadd.f32 %v525, %v617
        %v619 = vpop.f32.mrb[0].mxu0
        %v620 = vpop.f32.mrb[0].mxu0
        %v621 = vadd.f32 %v525, %v620
        %v622 = vpop.f32.mrb[0].mxu0
        %623 = vmatprep.mubr.bf16.mxu0 0
        %624 = vmatmul.mubr.bf16.gmra.mrb[0].mxu0 %v498
        %v625 = vpop.f32.mrb[0].mxu0
        %v626 = vadd.f32 %v525, %v625
        %v627 = vpop.f32.mrb[0].mxu0
        %v628 = vpop.f32.mrb[0].mxu0
        %v629 = vadd.f32 %v525, %v628
        %v630 = vpop.f32.mrb[0].mxu0
        %631 = vmatprep.mubr.bf16.mxu0 0
        %632 = vmatmul.mubr.bf16.gmra.mrb[0].mxu0 %v499
        %v633 = vpop.f32.mrb[0].mxu0
        %v634 = vadd.f32 %v525, %v633
        %v635 = vpop.f32.mrb[0].mxu0
        %v636 = vpop.f32.mrb[0].mxu0
        %v637 = vadd.f32 %v525, %v636
        %v638 = vpop.f32.mrb[0].mxu0
        %639 = vmatprep.mubr.bf16.mxu0 0
        %640 = vmatmul.mubr.bf16.gmra.mrb[0].mxu0 %v500
        %v641 = vpop.f32.mrb[0].mxu0
        %v642 = vadd.f32 %v525, %v641
        %v643 = vpop.f32.mrb[0].mxu0
        %v644 = vpop.f32.mrb[0].mxu0
        %v645 = vadd.f32 %v525, %v644
        %v646 = vpop.f32.mrb[0].mxu0
        %647 = vmatprep.mubr.bf16.mxu0 0
        %648 = vmatmul.mubr.bf16.gmra.mrb[0].mxu0 %v501
        %v649 = vpop.f32.mrb[0].mxu0
        %v650 = vadd.f32 %v525, %v649
        %v651 = vpop.f32.mrb[0].mxu0
        %v652 = vpop.f32.mrb[0].mxu0
        %v653 = vadd.f32 %v525, %v652
        %v654 = vpop.f32.mrb[0].mxu0
        %655 = vmatprep.mubr.bf16.mxu0 0
        %656 = vmatmul.mubr.bf16.gmra.mrb[0].mxu0 %v502
        %v657 = vpop.f32.mrb[0].mxu0
        %v658 = vadd.f32 %v525, %v657
        %v659 = vpop.f32.mrb[0].mxu0
        %v660 = vpop.f32.mrb[0].mxu0
        %v661 = vadd.f32 %v525, %v660
        %v662 = vpop.f32.mrb[0].mxu0
        %663 = vmatprep.mubr.bf16.mxu0 0
        %664 = vmatmul.mubr.bf16.gmra.mrb[0].mxu0 %v503
        %v665 = vpop.f32.mrb[0].mxu0
        %v666 = vadd.f32 %v525, %v665
        %v667 = vpop.f32.mrb[0].mxu0
        %v668 = vpop.f32.mrb[0].mxu0
        %v669 = vadd.f32 %v525, %v668
        %v670 = vpop.f32.mrb[0].mxu0
        %671 = vdwg.mxu0
        %vm672 = vcmask 15360
        %673 = vst.msk [vmem:[%s245] sm:$0xff] %vm672, %v610
        %674 = vst.msk [vmem:[%s245 + $0x8] sm:$0xff] %vm672, %v613
        %675 = vst.msk [vmem:[%s245 + $0x10] sm:$0xff] %vm672, %v618
        %676 = vst.msk [vmem:[%s245 + $0x18] sm:$0xff] %vm672, %v621
        %677 = vst.msk [vmem:[%s245 + $0x20] sm:$0xff] %vm672, %v626
        %678 = vst.msk [vmem:[%s245 + $0x28] sm:$0xff] %vm672, %v629
        %679 = vst.msk [vmem:[%s245 + $0x30] sm:$0xff] %vm672, %v634
        %680 = vst.msk [vmem:[%s245 + $0x38] sm:$0xff] %vm672, %v637
        %681 = vst.msk [vmem:[%s245 + $0x40] sm:$0xff] %vm672, %v642
        %682 = vst.msk [vmem:[%s245 + $0x48] sm:$0xff] %vm672, %v645
        %683 = vst.msk [vmem:[%s245 + $0x50] sm:$0xff] %vm672, %v650
        %684 = vst.msk [vmem:[%s245 + $0x58] sm:$0xff] %vm672, %v653
        %685 = vst.msk [vmem:[%s245 + $0x60] sm:$0xff] %vm672, %v658
        %686 = vst.msk [vmem:[%s245 + $0x68] sm:$0xff] %vm672, %v661
        %687 = vst.msk [vmem:[%s245 + $0x70] sm:$0xff] %vm672, %v666
        %688 = vst.msk [vmem:[%s245 + $0x78] sm:$0xff] %vm672, %v669
        %s689 = smul.u32 16, %s19
        %p690 = scmp.lt.s32.totalorder %s689, 31
        %s691 = scalar_select %p690, %s689, 31
        %s692 = smul.addr %s691, 8
        %s693 = scalar_lea.vmem %s5, %s692
        // Predicated region
        $region45: #{tpu_custom_call.1} parent=39 // pred_check
          %p694 = pneg %p147
        $region46: #{tpu_custom_call.1} parent=39 // pred_check_branch
          %696 = sbr.rel (%p694) target = $region48
        $region47: #{tpu_custom_call.1} parent=39 // pred_region
          %s697 = smul.u32 16, %s19
        $region48: #{tpu_custom_call.1} parent=39 // pred_fallthru
          _
      $region40: #{tpu_custom_call.1} parent=5 // pred_fallthru
        _
      %p698 = scmp.le.s32.totalorder 2, %s14
      // Predicated region
      $region49: #{tpu_custom_call.1} parent=5 // pred_check
        %p699 = pneg %p698
      $region50: #{tpu_custom_call.1} parent=5 // pred_check_branch
        %701 = sbr.rel (%p699) target = $region52
      $region51: #{tpu_custom_call.1} parent=5 // pred_region
        %s702 = ssub.s32 %s14, 2
        // Predicated region
        $region53: #{tpu_custom_call.1} parent=51 // pred_check
          %p703 = pneg %p153
        $region54: #{tpu_custom_call.1} parent=51 // pred_check_branch
          %705 = sbr.rel (%p703) target = $region56
        $region55: #{tpu_custom_call.1} parent=51 // pred_region
          %s706 = smul.u32 16, %s20
          %p707 = scmp.lt.s32.totalorder %s706, 31
          %s708 = scalar_select %p707, %s706, 31
          %s709 = smul.addr %s708, 8
          %s710 = scalar_lea.vmem %s5, %s709
        $region56: #{tpu_custom_call.1} parent=51 // pred_fallthru
          _
      $region52: #{tpu_custom_call.1} parent=5 // pred_fallthru
        _
    $region6: #{tpu_custom_call.1} parent=1 // loop_footer
      %s18 = sadd.s32 1, %s14
    $region7: #{tpu_custom_call.1} parent=1 // loop_footer_branch
      %13 = sbr.rel target = $region3
    $region8: #{tpu_custom_call.1} parent=1 // loop_exit
      _
    %711 = vsyncpa [#allocation3], 1
    %s712 = scalar_lea.sflag [#allocation3], 1
    %713 = vsyncpa %s712, 1

</llo_original>
